<compile_context>
chip_gen: v5e
topology: v5e:2x2
jax: 0.10.0
libtpu: 0.0.40
codegen_flags: <defaults>
</compile_context>

<pallas_src>
import jax
import jax.numpy as jnp
from jax import lax
from jax.experimental import pallas as pl
from jax.experimental.pallas import tpu as pltpu


def _fc_log_softmax_cb(x, w, b2d):
    """x: (TB, H), w: (C, H), b2d: (C, 1)  ->  (C, TB) log-probs (class-major).

    Transposed layout: C rides the 8 sublanes, TB rides the 128 lanes, so the
    log-softmax reduction over classes is a sublane reduce and every VPU/EUP
    vreg is fully lane-utilized.
    """
    logits = lax.dot_general(
        w, x,
        dimension_numbers=(((1,), (1,)), ((), ())),   # contract H with H (w @ x.T)
        preferred_element_type=jnp.float32,
    ) + b2d                                           # (C, 1) broadcasts over batch lanes
    m = jnp.max(logits, axis=0, keepdims=True)        # class-axis (sublane) reduce
    shifted = logits - m
    lse = jnp.log(jnp.sum(jnp.exp(shifted), axis=0, keepdims=True))
    return shifted - lse


def _attention_fc_kernel_whole(x_ref, w_ref, b_ref, o_ref):
    # x_ref: (1, B, H)  w_ref: (C, H)  b_ref: (C, 1)  o_ref: (C, B)
    x = x_ref[0]  # .squeeze(0) done in-kernel (plain indexed load)
    o_ref[...] = _fc_log_softmax_cb(x, w_ref[...], b_ref[...]).astype(o_ref.dtype)


def _attention_fc_kernel_tiled(x_ref, w_ref, b_ref, o_ref):
    # x_ref: (TB, H) -- leading singleton removed via pl.Squeezed() in the spec
    # o_ref: (C, TB) -- lane-dense store (TB is a multiple of 128)
    o_ref[...] = _fc_log_softmax_cb(
        x_ref[...], w_ref[...], b_ref[...]).astype(o_ref.dtype)


def attention_fc_forward(attention_vectors, weight, bias, *,
                         batch_tile=2048,
                         gridless_max_bytes=8 * 1024 * 1024):
    """attention_vectors: (1, B, H); weight: (C, H); bias: (C,) -> (B, C) log-probs."""
    _, B, H = attention_vectors.shape
    C = weight.shape[0]
    bias2d = bias.reshape(C, 1)                        # 2-D operand: clean (sublane, lane) layout
    out_shape = jax.ShapeDtypeStruct((C, B), jnp.float32)   # class-major, lane-dense

    # Per-problem VMEM footprint (x rows + class-major output), bytes.
    footprint_bytes = B * (H + C) * 4

    use_tiled = (
        footprint_bytes > gridless_max_bytes
        and batch_tile % 128 == 0                      # keep output tiles lane-dense
        and B % batch_tile == 0
        and (B // batch_tile) >= 2
    )

    if use_tiled:
        # Huge-batch path: stream x in tb-row tiles, keep weight/bias resident
        # in VMEM (constant index_map -> no per-step re-DMA), shard the batch
        # axis across TensorCores on v7x.
        tb = batch_tile
        out_cb = pl.pallas_call(
            _attention_fc_kernel_tiled,
            out_shape=out_shape,
            grid=(B // tb,),
            in_specs=[
                pl.BlockSpec((pl.Squeezed(), tb, H), lambda i: (0, i, 0)),
                pl.BlockSpec((C, H), lambda i: (0, 0)),   # VMEM-resident weight
                pl.BlockSpec((C, 1), lambda i: (0, 0)),   # VMEM-resident bias
            ],
            out_specs=pl.BlockSpec((C, tb), lambda i: (0, i)),
            compiler_params=pltpu.CompilerParams(
                dimension_semantics=("parallel",)),
        )(attention_vectors, weight, bias2d)
    else:
        # Common path: whole problem lives in VMEM; no grid, no pipelining
        # scaffolding, no double-buffering of tiny operands.  If the footprint
        # gets large, raise the scoped-VMEM limit rather than serializing into
        # grid steps (no parallelism benefit on single-TC v5e/v6e).
        compiler_params = None
        if footprint_bytes > 12 * 1024 * 1024:
            compiler_params = pltpu.CompilerParams(
                vmem_limit_bytes=min(64 * 1024 * 1024, 4 * footprint_bytes))
        out_cb = pl.pallas_call(
            _attention_fc_kernel_whole,
            out_shape=out_shape,
            in_specs=[
                pl.BlockSpec(memory_space=pltpu.MemorySpace.VMEM),
                pl.BlockSpec(memory_space=pltpu.MemorySpace.VMEM),
                pl.BlockSpec(memory_space=pltpu.MemorySpace.VMEM),
            ],
            out_specs=pl.BlockSpec(memory_space=pltpu.MemorySpace.VMEM),
            compiler_params=compiler_params,
        )(attention_vectors, weight, bias2d)

    # Module semantics are (B, n_classes); the (C, B) -> (B, C) flip is trivial
    # wrapper-side layout plumbing (the kernel's HBM store stays lane-dense).
    return out_cb.T


if __name__ == "__main__":
    # Module config: AttentionFC(attention_type, gru_hidden, n_classes, bidirectional=True)
    gru_hidden = 32
    bidirectional = True
    n_classes = 8
    batch = 8
    H = 2 * gru_hidden if bidirectional else gru_hidden  # 64

    key = jax.random.PRNGKey(0)
    k_x, k_w, k_b, k_big = jax.random.split(key, 4)

    # nn.Linear parameter shapes: weight (C, H), bias (C,)
    bound = 1.0 / jnp.sqrt(jnp.float32(H))
    weight = jax.random.uniform(k_w, (n_classes, H), jnp.float32, -bound, bound)
    bias = jax.random.uniform(k_b, (n_classes,), jnp.float32, -bound, bound)

    # attention_vectors is (1, B, H) as produced by the HAN attention stage.
    # (`output_state` is an unused forward arg in the PyTorch module; omitted.)
    attention_vectors = jax.random.normal(k_x, (1, batch, H), jnp.float32)

    out = jax.block_until_ready(attention_fc_forward(attention_vectors, weight, bias))
    ref = jax.nn.log_softmax(attention_vectors[0] @ weight.T + bias, axis=1)
    assert out.shape == (batch, n_classes)
    assert jnp.allclose(out, ref, atol=1e-5, rtol=1e-5)

    # Also exercise the batch-tiled (parallel-over-B, lane-dense-output) path.
    big_b = 1024
    av_big = jax.random.normal(k_big, (1, big_b, H), jnp.float32)
    out_big = jax.block_until_ready(
        attention_fc_forward(av_big, weight, bias,
                             batch_tile=256, gridless_max_bytes=0))
    ref_big = jax.nn.log_softmax(av_big[0] @ weight.T + bias, axis=1)
    assert out_big.shape == (big_b, n_classes)
    assert jnp.allclose(out_big, ref_big, atol=1e-5, rtol=1e-5)

    print("KERNEL_OK")
</pallas_src>

<mosaic_0001>
module attributes {stable_mosaic.version = 11 : i64} {
  func.func @_attention_fc_kernel_whole(%arg0: memref<1x8x64xf32, #tpu.memory_space<vmem>>, %arg1: memref<8x64xf32, #tpu.memory_space<vmem>>, %arg2: memref<8x1xf32, #tpu.memory_space<vmem>>, %arg3: memref<8x8xf32, #tpu.memory_space<vmem>>) attributes {dimension_semantics = [], scalar_prefetch = 0 : i64, scratch_operands = 0 : i64, tpu.core_type = #tpu.core_type<tc>} {
    %c0 = arith.constant 0 : index
    %c0_0 = arith.constant 0 : index
    %c0_1 = arith.constant 0 : index
    %0 = vector.load %arg0[%c0, %c0_0, %c0_1] : memref<1x8x64xf32, #tpu.memory_space<vmem>>, vector<1x8x64xf32>
    %1 = vector.shape_cast %0 : vector<1x8x64xf32> to vector<8x64xf32>
    %c0_2 = arith.constant 0 : index
    %c0_3 = arith.constant 0 : index
    %2 = vector.load %arg1[%c0_2, %c0_3] : memref<8x64xf32, #tpu.memory_space<vmem>>, vector<8x64xf32>
    %c0_4 = arith.constant 0 : index
    %c0_5 = arith.constant 0 : index
    %3 = vector.load %arg2[%c0_4, %c0_5] : memref<8x1xf32, #tpu.memory_space<vmem>>, vector<8x1xf32>
    %cst = arith.constant dense<0.000000e+00> : vector<8x8xf32>
    %4 = tpu.matmul %2, %1, %cst {dimension_numbers = #tpu.dot_dimension_numbers<[1], [1], [0], [0], [0, 0, 1, 0], [], []>} : vector<8x64xf32>, vector<8x64xf32>, vector<8x8xf32> -> vector<8x8xf32>
    %5 = vector.broadcast %3 : vector<8x1xf32> to vector<8x8xf32>
    %6 = arith.addf %4, %5 : vector<8x8xf32>
    %cst_6 = arith.constant dense<0xFF800000> : vector<8xf32>
    %7 = vector.multi_reduction <maximumf>, %6, %cst_6 [0] : vector<8x8xf32> to vector<8xf32>
    %8 = vector.shape_cast %7 : vector<8xf32> to vector<1x8xf32>
    %9 = vector.broadcast %8 : vector<1x8xf32> to vector<8x8xf32>
    %10 = arith.subf %6, %9 : vector<8x8xf32>
    %11 = math.exp %10 : vector<8x8xf32>
    %cst_7 = arith.constant dense<0.000000e+00> : vector<8xf32>
    %12 = vector.multi_reduction <add>, %11, %cst_7 [0] : vector<8x8xf32> to vector<8xf32>
    %13 = vector.shape_cast %12 : vector<8xf32> to vector<1x8xf32>
    %14 = math.log %13 : vector<1x8xf32>
    %15 = vector.broadcast %14 : vector<1x8xf32> to vector<8x8xf32>
    %16 = arith.subf %10, %15 : vector<8x8xf32>
    %c0_8 = arith.constant 0 : index
    %c0_9 = arith.constant 0 : index
    %17 = vector.load %arg3[%c0_8, %c0_9] : memref<8x8xf32, #tpu.memory_space<vmem>>, vector<8x8xf32>
    tpu.vector_store %arg3[%c0_8, %c0_9], %16 {strides = array<i32>} : memref<8x8xf32, #tpu.memory_space<vmem>>, vector<8x8xf32>,
    return
  }
}

</mosaic_0001>

<llo_original>
// kernel: tpu_custom_call.1
$region0: #{tpu_custom_call.1}
  #allocation0 [shape = 'u32[]', space=smem, size = 0x4, offset = 0x4, fixed_abs, tag = 'smem constant byte address 0x4 - core index']
  #allocation1 [shape = 'u32[72,128]{1,0:T(1,128)}', space=vmem, size = 0x9000, scoped, tag = 'internal scratch']
  %s0 = inlined_call_operand.vmem [shape: f32[1,8,64], index: 0, kind: input, shape index: {}]
  %s1 = inlined_call_operand.hbm [shape: f32[8,64], index: 1, kind: input, shape index: {}]
  %s2 = inlined_call_operand.vmem [shape: f32[8,1], index: 2, kind: input, shape index: {}]
  %s3 = inlined_call_operand.hbm [shape: f32[8,8], index: 3, kind: output, shape index: {}]
  %s4 = sld [smem:[#allocation0]]
  $region26: #{tpu_custom_call.1} parent=0
    _
  %s6 = ssub.s32 1, %s4
  %s7 = scalar_select 0, %s6, %s4
  $region1: #{tpu_custom_call.1} parent=0
    #allocation2 [shape = 'u8[4096]{0}', space=vmem, size = 0x1000, scoped, tag = 'input window, operand 1, single buffered']
    #allocation3 [shape = 's32[1]{0}', space=sflag, size = 0x4, scoped, tag = 'scoped memory for tpu_custom_call.1']
    #allocation4 [shape = 's32[1]{0}', space=sflag, size = 0x4, scoped, tag = 'scoped memory for tpu_custom_call.1']
    #allocation5 [shape = 'u8[4096]{0}', space=vmem, size = 0x1000, scoped, tag = 'output window, operand 0, single buffered']
    %8 = vsyncpa [#allocation3], 0
    %9 = vsyncpa [#allocation4], 0
    // Predicated region
    $region2: #{tpu_custom_call.1} parent=1 // pred_check
      _
    $region3: #{tpu_custom_call.1} parent=1 // pred_check_branch
      %11 = sbr.rel (0) target = $region5
    $region4: #{tpu_custom_call.1} parent=1 // pred_region
      _
    $region5: #{tpu_custom_call.1} parent=1 // pred_fallthru
      _
    // Predicated region
    $region6: #{tpu_custom_call.1} parent=1 // pred_check
      _
    $region7: #{tpu_custom_call.1} parent=1 // pred_check_branch
      %13 = sbr.rel (0) target = $region9
    $region8: #{tpu_custom_call.1} parent=1 // pred_region
      %15 = vsyncadd [#allocation3], 0
      %s17 = sshll.u32 %s1, 4
      %s18 = int_to_ptr.hbm [resolvable:$true] %s17
      %s19 = sshll.u32 [#allocation2], 4
      %s20 = int_to_ptr.vmem [resolvable:$true] %s19
      %22 = dma.hbm_to_vmem [thread:$0]  %s18, 128, %s20, [#allocation3]
    $region9: #{tpu_custom_call.1} parent=1 // pred_fallthru
      _
    // Predicated region
    $region10: #{tpu_custom_call.1} parent=1 // pred_check
      _
    $region11: #{tpu_custom_call.1} parent=1 // pred_check_branch
      %24 = sbr.rel (0) target = $region13
    $region12: #{tpu_custom_call.1} parent=1 // pred_region
      _
    $region13: #{tpu_custom_call.1} parent=1 // pred_fallthru
      _
    // Predicated region
    $region14: #{tpu_custom_call.1} parent=1 // pred_check
      _
    $region15: #{tpu_custom_call.1} parent=1 // pred_check_branch
      %26 = sbr.rel (0) target = $region17
    $region16: #{tpu_custom_call.1} parent=1 // pred_region
      %28 = dma.done [#allocation3], 128
    $region17: #{tpu_custom_call.1} parent=1 // pred_fallthru
      _
    %v29 = vld [vmem:[%s0] sm:$0xff]
    %v30 = vld [vmem:[#allocation2] sm:$0xff]
    %v31 = vld [vmem:[%s2] sm:$0xff]
    %33 = vset.pattern.permute.xlu0 0
    %34 = vperm.xlu0 %33, %v31
    %v35 = vpop.permute.xlu0 %34
    %vm37 = vcmask 523264
    %v39 = vsel %vm37, %v30, 0
    %v42 = vsel %vm37, %v29, 0
    %44 = vmatpush.xpose.msra.mxu0 0.0
    %45 = vmatpush.xpose.msra.mxu0 0.0
    %46 = vmatpush.xpose.msra.mxu0 0.0
    %47 = vmatpush.xpose.msra.mxu0 0.0
    %48 = vmatpush.xpose.msra.mxu0 0.0
    %49 = vmatpush.xpose.msra.mxu0 0.0
    %50 = vmatpush.xpose.msra.mxu0 0.0
    %51 = vmatpush.xpose.msra.mxu0 0.0
    %52 = vmatpush.xpose.msra.mxu0 0.0
    %53 = vmatpush.xpose.msra.mxu0 0.0
    %54 = vmatpush.xpose.msra.mxu0 0.0
    %55 = vmatpush.xpose.msra.mxu0 0.0
    %56 = vmatpush.xpose.msra.mxu0 0.0
    %57 = vmatpush.xpose.msra.mxu0 0.0
    %58 = vmatpush.xpose.msra.mxu0 0.0
    %59 = vmatpush.xpose.msra.mxu0 %v42
    %60 = vmatmul.f32.gmra.mxu0 %v39
    %v61 = vpop.f32.mrf.mxu0
    %v62 = vadd.f32 %v35, %v61
    %63 = vdwg.mxu0
    %vm64 = vcmask 64512
    %v65 = vsel %vm64, %v62, -inf
    %v66 = vrot.slane %v65, 4
    %v67 = vmax.f32 %v65, %v66
    %v68 = vrot.slane %v67, 2
    %v69 = vmax.f32 %v67, %v68
    %v70 = vrot.slane %v69, 1
    %v71 = vmax.f32 %v69, %v70
    %v72 = vsub.f32 %v62, %v71
    %v73 = vmul.f32 %v72, 1.442695
    %v74 = vpow.pop %v73
    %v75 = vsel %vm64, %v74, 0.0
    %v76 = vrot.slane %v75, 4
    %v77 = vadd.f32 %v75, %v76
    %v78 = vrot.slane %v77, 2
    %v79 = vadd.f32 %v77, %v78
    %v80 = vrot.slane %v79, 1
    %v81 = vadd.f32 %v79, %v80
    %v82 = vlog2.pop %v81
    %v83 = vmul.f32 %v82, 0.6931472
    %v84 = vsub.f32 %v72, %v83
    %85 = vst.msk [vmem:[#allocation5] sm:$0xff] %vm64, %v84
    // Predicated region
    $region18: #{tpu_custom_call.1} parent=1 // pred_check
      _
    $region19: #{tpu_custom_call.1} parent=1 // pred_check_branch
      %87 = sbr.rel (0) target = $region21
    $region20: #{tpu_custom_call.1} parent=1 // pred_region
      %89 = vsyncadd [#allocation4], 0
      %s91 = sshll.u32 [#allocation5], 4
      %s92 = int_to_ptr.vmem [resolvable:$true] %s91
      %s93 = sshll.u32 %s3, 4
      %s94 = int_to_ptr.hbm [resolvable:$true] %s93
      %96 = dma.vmem_to_hbm [thread:$0]  %s92, 128, %s94, [#allocation4]
    $region21: #{tpu_custom_call.1} parent=1 // pred_fallthru
      _
    // Predicated region
    $region22: #{tpu_custom_call.1} parent=1 // pred_check
      _
    $region23: #{tpu_custom_call.1} parent=1 // pred_check_branch
      %98 = sbr.rel (0) target = $region25
    $region24: #{tpu_custom_call.1} parent=1 // pred_region
      %100 = dma.done [#allocation4], 128
    $region25: #{tpu_custom_call.1} parent=1 // pred_fallthru
      _
    %101 = vsyncpa [#allocation3], 1
    %102 = vsyncpa [#allocation4], 1

</llo_original>
